<compile_context>
chip_gen: v7x
topology: tpu7x:2x2x1
jax: 0.10.0
libtpu: 0.0.40
codegen_flags: <defaults>
</compile_context>

<pallas_src>
import functools
import math

import numpy as np
import jax
import jax.numpy as jnp
from jax.experimental import pallas as pl
from jax.experimental.pallas import tpu as pltpu


# ----------------------------------------------------------------------------- kernel
def _row_moment_kernel(x_ref, acc1_ref, accr_ref, *, tr, tcc, s0, cin,
                       mask_rows, mask_lanes):
    """Streaming per-lane row-moment accumulation.

    x_ref    : (N, tr, tcc) f32  block of the field viewed as (N, S0, Cin)
    acc1_ref : (N, tcc)     f32  += sum_r x[:, r, :]                  (lane-resident)
    accr_ref : (N, tcc)     f32  += sum_r row_index(r) * x[:, r, :]   (lane-resident)

    Lane j of the accumulators maps to one fixed (inner-voxel, component) pair of the
    original field, so the remaining identity-grid weighting (inner coordinates,
    component one-hot) is applied on the tiny accumulators in the wrapper epilogue.
    """
    c = pl.program_id(0)          # parallel lane-chunk axis (megacore split on v7x)
    r = pl.program_id(1)          # innermost reduction over outer-row chunks

    @pl.when(r == 0)
    def _init():
        acc1_ref[...] = jnp.zeros_like(acc1_ref)
        accr_ref[...] = jnp.zeros_like(accr_ref)

    x = x_ref[...]                                                  # (N, tr, tcc)
    rows = r * tr + jax.lax.broadcasted_iota(jnp.int32, x.shape, 1)  # outer coordinate

    if mask_rows or mask_lanes:
        valid = None
        if mask_rows:
            valid = rows < s0
        if mask_lanes:
            lanes = c * tcc + jax.lax.broadcasted_iota(jnp.int32, x.shape, 2)
            ok = lanes < cin
            valid = ok if valid is None else jnp.logical_and(valid, ok)
        # Mask the data itself: the out-of-bounds part of the block is stale VMEM and
        # may contain NaN (NaN * 0 != 0).
        x = jnp.where(valid, x, 0.0)

    acc1_ref[...] += jnp.sum(x, axis=1)
    accr_ref[...] += jnp.sum(x * rows.astype(jnp.float32), axis=1)


def _choose_tiles(n, s0, cin, block_rows=None, block_lanes=None):
    """Pick (row, lane) block sizes honoring the (8,128)-or-full constraint."""
    # Lane-chunk size: multiple of 128, or the full inner extent.
    if block_lanes is not None:
        tcc = min(int(block_lanes), cin)
        if tcc != cin:
            tcc = max(128, (tcc // 128) * 128)
    else:
        tcc = cin if cin <= 2048 else 2048
    # Row-chunk size: multiple of 8, or the full outer extent.  Target ~4 MiB of
    # field per grid step (amortizes the ~0.35us fixed per-step overhead on every
    # generation while keeping the double-buffered footprint far below VMEM limits).
    if block_rows is not None:
        tr = int(block_rows)
    else:
        target_bytes = 4 * 1024 * 1024
        tr = max(1, target_bytes // (n * max(tcc, 1) * 4))
    tr = min(tr, s0)
    if tr != s0:
        tr = max(8, (tr // 8) * 8)
        tr = min(tr, s0)
        if tr != s0 and tr % 8 != 0:
            tr = s0
    return tr, tcc


def _row_moments(x3, block_rows=None, block_lanes=None):
    """Return (acc1, accr), each (N, Cin) f32, from x3 = field.reshape(N, S0, Cin)."""
    n, s0, cin = (int(d) for d in x3.shape)
    tr, tcc = _choose_tiles(n, s0, cin, block_rows, block_lanes)
    num_c = pl.cdiv(cin, tcc)
    num_r = pl.cdiv(s0, tr)
    mask_rows = (s0 % tr) != 0
    mask_lanes = (cin % tcc) != 0

    kernel = functools.partial(
        _row_moment_kernel, tr=tr, tcc=tcc, s0=s0, cin=cin,
        mask_rows=mask_rows, mask_lanes=mask_lanes)

    # VMEM footprint estimate with (8,128) padding and double buffering.
    pad8 = lambda v: -(-v // 8) * 8
    pad128 = lambda v: -(-v // 128) * 128
    in_block = n * pad8(tr) * pad128(tcc) * 4
    acc_block = pad8(n) * pad128(tcc) * 4
    est = 2 * in_block + 4 * acc_block
    vmem_limit = int(min(max(2 * est, 16 * 2**20), 48 * 2**20))

    acc_shape = jax.ShapeDtypeStruct((n, cin), jnp.float32)
    acc_spec = pl.BlockSpec((n, tcc), lambda c, r: (0, c))
    return pl.pallas_call(
        kernel,
        out_shape=(acc_shape, acc_shape),
        grid_spec=pltpu.PrefetchScalarGridSpec(
            num_scalar_prefetch=0,
            grid=(num_c, num_r),
            in_specs=[pl.BlockSpec((n, tr, tcc), lambda c, r: (0, r, c))],
            out_specs=(acc_spec, acc_spec),
        ),
        compiler_params=pltpu.CompilerParams(
            dimension_semantics=("parallel", "arbitrary"),
            vmem_limit_bytes=vmem_limit),
    )(x3)


# ------------------------------------------------------------------------------- glue
def _decode_moments(acc1, accr, spatial_shape, dim):
    """Combine the per-lane accumulators into mom (N, dim+1, dim).

    Row order of mom matches the homogeneous identity grid [i_0, ..., i_{dim-1}, 1].
    """
    cin = int(acc1.shape[-1])
    j = jnp.arange(cin, dtype=jnp.int32)
    comp = j % dim                                  # component index k
    inner = j // dim                                # flattened inner-voxel index
    sel = (comp[:, None] == jnp.arange(dim, dtype=jnp.int32)[None, :]).astype(jnp.float32)

    inner_shape = spatial_shape[1:]
    strides = []
    acc = 1
    for s in reversed(inner_shape):
        strides.insert(0, acc)
        acc *= s
    feats = []
    for s, st in zip(inner_shape, strides):
        feats.append(((inner // st) % s).astype(jnp.float32))
    feats.append(jnp.ones((cin,), jnp.float32))
    feats = jnp.stack(feats, axis=1)                # (Cin, dim): [i_1..i_{dim-1}, 1]

    hp = jax.lax.Precision.HIGHEST                  # tiny contractions; keep exact f32
    mom0 = jnp.einsum('nj,jk->nk', accr, sel, precision=hp)            # i_0 row
    mom_rest = jnp.einsum('nj,jf,jk->nfk', acc1, feats, sel, precision=hp)
    return jnp.concatenate([mom0[:, None, :], mom_rest], axis=1)       # (N, dim+1, dim)


def _analytic_identity_moments(spatial_shape):
    """Exact G^T G (dim, dim) and sum(G) (dim,) of the regular identity grid."""
    s = np.asarray(spatial_shape, dtype=np.float64)
    m = float(np.prod(s))
    mu = (s - 1.0) / 2.0
    sum_g = m * mu
    gtg = m * np.outer(mu, mu)
    np.fill_diagonal(gtg, m * (s - 1.0) * (2.0 * s - 1.0) / 6.0)
    return gtg, sum_g


def _affine_matmul(a, b):
    """Compose square homogeneous affines (nitorch spatial.affine_matmul semantics)."""
    dim = a.shape[-1] - 1
    za, ta = a[..., :dim, :dim], a[..., :dim, -1]
    zb, tb = b[..., :dim, :dim], b[..., :dim, -1]
    z = za @ zb
    t = jnp.einsum("...ij,...j->...i", za, tb) + ta
    top = jnp.concatenate([z, t[..., None]], axis=-1)
    bottom = jnp.zeros_like(top[..., :1, :]).at[..., 0, -1].set(1.0)
    return jnp.concatenate([top, bottom], axis=-2)


def _affine_inv(a):
    dim = a.shape[-1] - 1
    z, t = a[..., :dim, :dim], a[..., :dim, -1]
    zi = jnp.linalg.inv(z)
    ti = -jnp.einsum("...ij,...j->...i", zi, t)
    top = jnp.concatenate([zi, ti[..., None]], axis=-1)
    bottom = jnp.zeros_like(top[..., :1, :]).at[..., 0, -1].set(1.0)
    return jnp.concatenate([top, bottom], axis=-2)


def _affine_lmdiv(a, b):
    return _affine_matmul(_affine_inv(a), b)


@functools.partial(jax.jit, static_argnames=("shift", "block_rows", "block_lanes"))
def _dense_to_affine_impl(grid, *, shift=True, block_rows=None, block_lanes=None):
    grid = grid.astype(jnp.float32)
    n = int(grid.shape[0])
    spatial_shape = tuple(int(s) for s in grid.shape[1:-1])
    dim = int(grid.shape[-1])
    if len(spatial_shape) != dim:
        raise ValueError("grid must have shape (N, *spatial, dim) with len(spatial)==dim")
    d1 = dim + 1
    m = int(math.prod(spatial_shape))
    s0 = spatial_shape[0]
    cin = (m // s0) * dim

    # Faithful to the reference `sumw = grid[1:-1].numel()` (slices the *batch* axis),
    # but guarded: for n <= 2 that value is 0 and makes gg singular, so fall back to
    # the voxel count.
    sumw = float(max(n - 2, 0) * m * dim)
    if sumw == 0.0:
        sumw = float(m)

    # ---- hot path (Pallas): one streaming pass over the field, natural layout ----
    x3 = grid.reshape(n, s0, cin)                       # free reshape, no transpose
    acc1, accr = _row_moments(x3, block_rows, block_lanes)
    mom = _decode_moments(acc1, accr, spatial_shape, dim)        # (N, dim+1, dim)

    # ---- identity-grid moments: exact closed forms, float64 host-side inverse ----
    gtg, sum_g_np = _analytic_identity_moments(spatial_shape)
    gg_np = np.zeros((d1, d1), np.float64)
    gg_np[:dim, :dim] = gtg
    gg_np[:dim, -1] = sum_g_np
    gg_np[-1, :dim] = sum_g_np
    gg_np[-1, -1] = sumw
    igg = jnp.asarray(np.linalg.inv(gg_np), jnp.float32)
    sum_g = jnp.asarray(sum_g_np, jnp.float32)

    gtd = mom[:, :dim, :]                                        # (N, dim, dim)
    sum_d = mom[:, dim, :]                                       # (N, dim)
    top = jnp.concatenate(
        [gtd, jnp.broadcast_to(sum_g.reshape(1, dim, 1), (n, dim, 1))], axis=-1)
    bottom = jnp.concatenate(
        [sum_d[:, None, :], jnp.full((n, 1, 1), sumw, jnp.float32)], axis=-1)
    gd = jnp.concatenate([top, bottom], axis=1)                  # (N, d1, d1)

    eye = jnp.eye(d1, dtype=jnp.float32).at[-1, -1].set(0.0)
    affine = jnp.swapaxes(
        jnp.einsum("ij,njk->nik", igg, gd,
                   precision=jax.lax.Precision.HIGHEST), -1, -2) + eye

    if shift:
        affine_shift = jnp.eye(d1, dtype=jnp.float32)
        # NB: the reference's `.sub(1).div(2).neg()` chain is out-of-place and its
        # result discarded, so the translation stays equal to `shape`; reproduced.
        affine_shift = affine_shift.at[:dim, -1].set(
            jnp.asarray(spatial_shape, dtype=jnp.float32))
        affine = _affine_matmul(affine, affine_shift)
        affine = _affine_lmdiv(affine_shift, affine)
    return affine


def dense_to_affine(grid, shift=True, weights=None, block_rows=None, block_lanes=None):
    """Least-squares affine closest to a dense displacement grid (N, *spatial, dim)."""
    if weights is not None:
        # TODO(synk): optional weighted least-squares path not ported (default is None).
        raise NotImplementedError("weights is not supported in this Pallas port")
    return _dense_to_affine_impl(grid, shift=shift,
                                 block_rows=block_rows, block_lanes=block_lanes)


class DenseToAffine:
    """Convert a dense displacement field to an affine matrix (Pallas/TPU port)."""

    def __init__(self, shift=True):
        self.shift = shift

    def __call__(self, grid, weights=None):
        return dense_to_affine(grid, shift=self.shift, weights=weights)


# ------------------------------------------------------------------------------- main
if __name__ == "__main__":
    key = jax.random.PRNGKey(0)
    k1, k2 = jax.random.split(key)

    # Case 1: 3-D displacement field (Cin = 16*16*3 = 768 lanes, multiple of 128).
    n1, spatial1, dim1 = 3, (8, 16, 16), 3
    disp1 = 0.1 * jax.random.normal(k1, (n1, *spatial1, dim1), dtype=jnp.float32)

    # Case 2: 2-D displacement field with ragged extents (Cin = 26, S0 = 10).
    n2, spatial2, dim2 = 3, (10, 13), 2
    disp2 = 0.1 * jax.random.normal(k2, (n2, *spatial2, dim2), dtype=jnp.float32)

    module = DenseToAffine(shift=True)
    aff1 = jax.block_until_ready(module(disp1))
    aff2 = jax.block_until_ready(module(disp2))
    assert aff1.shape == (n1, dim1 + 1, dim1 + 1)
    assert aff2.shape == (n2, dim2 + 1, dim2 + 1)
    assert bool(jnp.all(jnp.isfinite(aff1)))
    assert bool(jnp.all(jnp.isfinite(aff2)))

    # ---- float64 numpy reference of the full module (same sumw / shift quirks) ----
    def _np_dense_to_affine(disp, shift=True):
        disp = np.asarray(disp, np.float64)
        n = disp.shape[0]
        spatial = disp.shape[1:-1]
        dim = disp.shape[-1]
        d1 = dim + 1
        m = int(np.prod(spatial))
        coords = np.stack(np.meshgrid(
            *[np.arange(s, dtype=np.float64) for s in spatial], indexing="ij"),
            axis=-1).reshape(m, dim)
        d = disp.reshape(n, m, dim)
        sumw = float(max(n - 2, 0) * m * dim)
        if sumw == 0.0:
            sumw = float(m)
        gg = np.zeros((d1, d1))
        gg[:dim, :dim] = coords.T @ coords
        gg[:dim, -1] = coords.sum(0)
        gg[-1, :dim] = coords.sum(0)
        gg[-1, -1] = sumw
        igg = np.linalg.inv(gg)
        eye = np.eye(d1)
        eye[-1, -1] = 0.0
        out = np.zeros((n, d1, d1))
        for i in range(n):
            gd = np.zeros((d1, d1))
            gd[:dim, :dim] = coords.T @ d[i]
            gd[:dim, -1] = coords.sum(0)
            gd[-1, :dim] = d[i].sum(0)
            gd[-1, -1] = sumw
            a = (igg @ gd).T + eye
            if shift:
                ash = np.eye(d1)
                ash[:dim, -1] = np.asarray(spatial, np.float64)
                a = np.linalg.inv(ash) @ (a @ ash)
            out[i] = a
        return out

    np.testing.assert_allclose(np.asarray(aff1), _np_dense_to_affine(disp1),
                               rtol=1e-3, atol=1e-3)
    np.testing.assert_allclose(np.asarray(aff2), _np_dense_to_affine(disp2),
                               rtol=1e-3, atol=1e-3)

    # ---- exercise the multi-chunk / ragged-tile kernel paths explicitly ----------
    def _ref_moments(disp):
        disp = np.asarray(disp, np.float64)
        n = disp.shape[0]
        dim = disp.shape[-1]
        spatial = disp.shape[1:-1]
        m = int(np.prod(spatial))
        d_np = disp.reshape(n, m, dim)
        coords = np.stack(np.meshgrid(
            *[np.arange(s, dtype=np.float64) for s in spatial], indexing="ij"),
            axis=-1).reshape(m, dim)
        ghom = np.concatenate([coords, np.ones((m, 1))], axis=-1)    # (M, dim+1)
        return np.einsum("mf,nmk->nfk", ghom, d_np)                  # (N, dim+1, dim)

    def _pallas_moments(disp, block_rows=None, block_lanes=None):
        disp = disp.astype(jnp.float32)
        n = disp.shape[0]
        dim = int(disp.shape[-1])
        spatial = tuple(int(s) for s in disp.shape[1:-1])
        s0 = spatial[0]
        cin = int(np.prod(spatial[1:], dtype=np.int64)) * dim
        x3 = disp.reshape(n, s0, cin)
        acc1, accr = _row_moments(x3, block_rows, block_lanes)
        return _decode_moments(acc1, accr, spatial, dim)

    for disp, br, bl in ((disp1, None, 256),   # 3 even lane chunks ("parallel" axis)
                         (disp1, None, 512),   # ragged lane chunk (768 % 512 != 0)
                         (disp2, 8, None),     # ragged row chunk + 2 reduction steps
                         (disp1, None, None),  # default auto-sizing (single block)
                         (disp2, None, None)):
        mom = jax.block_until_ready(_pallas_moments(disp, br, bl))
        np.testing.assert_allclose(np.asarray(mom), _ref_moments(disp),
                                   rtol=1e-3, atol=1e-3)

    print("KERNEL_OK")
</pallas_src>

<mosaic_0001>
module attributes {stable_mosaic.version = 11 : i64} {
  func.func @_row_moment_kernel(%arg0: i32, %arg1: i32, %arg2: memref<3x8x768xf32, #tpu.memory_space<vmem>>, %arg3: memref<3x768xf32, #tpu.memory_space<vmem>>, %arg4: memref<3x768xf32, #tpu.memory_space<vmem>>) attributes {dimension_semantics = [#tpu.dimension_semantics<parallel>, #tpu.dimension_semantics<arbitrary>], iteration_bounds = array<i64: 1, 1>, scalar_prefetch = 0 : i64, scratch_operands = 0 : i64, tpu.core_type = #tpu.core_type<tc>, window_params = [{transform_indices = @transform_0, window_bounds = array<i64: 3, 8, 768>}, {transform_indices = @transform_1, window_bounds = array<i64: 3, 768>}, {transform_indices = @transform_2, window_bounds = array<i64: 3, 768>}]} {
    %c0_i32 = arith.constant 0 : i32
    %0 = arith.cmpi eq, %arg1, %c0_i32 : i32
    %1 = arith.extui %0 : i1 to i32
    %c0_i32_0 = arith.constant 0 : i32
    %2 = arith.cmpi ne, %1, %c0_i32_0 : i32
    scf.if %2 {
      %cst_12 = arith.constant 0.000000e+00 : f32
      %18 = vector.broadcast %cst_12 : f32 to vector<3x768xf32>
      %c0_13 = arith.constant 0 : index
      %c0_14 = arith.constant 0 : index
      %19 = vector.load %arg3[%c0_13, %c0_14] : memref<3x768xf32, #tpu.memory_space<vmem>>, vector<3x768xf32>
      tpu.vector_store %arg3[%c0_13, %c0_14], %18 {strides = array<i32>} : memref<3x768xf32, #tpu.memory_space<vmem>>, vector<3x768xf32>,
      %cst_15 = arith.constant 0.000000e+00 : f32
      %20 = vector.broadcast %cst_15 : f32 to vector<3x768xf32>
      %c0_16 = arith.constant 0 : index
      %c0_17 = arith.constant 0 : index
      %21 = vector.load %arg4[%c0_16, %c0_17] : memref<3x768xf32, #tpu.memory_space<vmem>>, vector<3x768xf32>
      tpu.vector_store %arg4[%c0_16, %c0_17], %20 {strides = array<i32>} : memref<3x768xf32, #tpu.memory_space<vmem>>, vector<3x768xf32>,
    } else {
    }
    %c0 = arith.constant 0 : index
    %c0_1 = arith.constant 0 : index
    %c0_2 = arith.constant 0 : index
    %3 = vector.load %arg2[%c0, %c0_1, %c0_2] : memref<3x8x768xf32, #tpu.memory_space<vmem>>, vector<3x8x768xf32>
    %c8_i32 = arith.constant 8 : i32
    %4 = arith.muli %arg1, %c8_i32 : i32
    %5 = tpu.iota {dimensions = array<i32: 1>} : vector<3x8x768xi32>
    %6 = vector.broadcast %4 : i32 to vector<3x8x768xi32>
    %7 = arith.addi %6, %5 : vector<3x8x768xi32>
    %c0_3 = arith.constant 0 : index
    %c0_4 = arith.constant 0 : index
    %8 = vector.load %arg3[%c0_3, %c0_4] : memref<3x768xf32, #tpu.memory_space<vmem>>, vector<3x768xf32>
    %cst = arith.constant dense<0.000000e+00> : vector<3x768xf32>
    %9 = vector.multi_reduction <add>, %3, %cst [1] : vector<3x8x768xf32> to vector<3x768xf32>
    %10 = arith.addf %8, %9 : vector<3x768xf32>
    %c0_5 = arith.constant 0 : index
    %c0_6 = arith.constant 0 : index
    %11 = vector.load %arg3[%c0_5, %c0_6] : memref<3x768xf32, #tpu.memory_space<vmem>>, vector<3x768xf32>
    tpu.vector_store %arg3[%c0_5, %c0_6], %10 {strides = array<i32>} : memref<3x768xf32, #tpu.memory_space<vmem>>, vector<3x768xf32>,
    %c0_7 = arith.constant 0 : index
    %c0_8 = arith.constant 0 : index
    %12 = vector.load %arg4[%c0_7, %c0_8] : memref<3x768xf32, #tpu.memory_space<vmem>>, vector<3x768xf32>
    %13 = arith.sitofp %7 : vector<3x8x768xi32> to vector<3x8x768xf32>
    %14 = arith.mulf %3, %13 : vector<3x8x768xf32>
    %cst_9 = arith.constant dense<0.000000e+00> : vector<3x768xf32>
    %15 = vector.multi_reduction <add>, %14, %cst_9 [1] : vector<3x8x768xf32> to vector<3x768xf32>
    %16 = arith.addf %12, %15 : vector<3x768xf32>
    %c0_10 = arith.constant 0 : index
    %c0_11 = arith.constant 0 : index
    %17 = vector.load %arg4[%c0_10, %c0_11] : memref<3x768xf32, #tpu.memory_space<vmem>>, vector<3x768xf32>
    tpu.vector_store %arg4[%c0_10, %c0_11], %16 {strides = array<i32>} : memref<3x768xf32, #tpu.memory_space<vmem>>, vector<3x768xf32>,
    return
  }
  func.func @transform_0(%arg0: i32, %arg1: i32) -> (i32, i32, i32) {
    %c0_i32 = arith.constant 0 : i32
    %c0_i32_0 = arith.constant 0 : i32
    return %c0_i32, %arg1, %arg0 : i32, i32, i32
  }
  func.func @transform_1(%arg0: i32, %arg1: i32) -> (i32, i32) {
    %c0_i32 = arith.constant 0 : i32
    %c0_i32_0 = arith.constant 0 : i32
    return %c0_i32, %arg0 : i32, i32
  }
  func.func @transform_2(%arg0: i32, %arg1: i32) -> (i32, i32) {
    %c0_i32 = arith.constant 0 : i32
    %c0_i32_0 = arith.constant 0 : i32
    return %c0_i32, %arg0 : i32, i32
  }
}

</mosaic_0001>

<llo_original>
// kernel: custom-call.11
$region0: #{custom-call.11}
  %s0 = inlined_call_operand.vmem [shape: f32[3,3], index: 0, kind: input, shape index: {}]
  %s1 = inlined_call_operand.vmem [shape: f32[3,3], index: 1, kind: output, shape index: {0}]
  %s2 = inlined_call_operand.hbm [shape: s32[3], index: 2, kind: output, shape index: {1}]
  %s3 = inlined_call_operand.vmem [shape: s32[3], index: 3, kind: output, shape index: {2}]
  %4 = xla_tuple %s1, %s2, %s3
  $region1: #{custom-call.11} parent=0
    #allocation0 [shape = 'u8[4096]{0}', space=vmem, size = 0x1000, scoped, tag = 'operand span for operand 0']
    #allocation1 [shape = 'u8[2048]{0}', space=vmem, size = 0x800, scoped, tag = 'packed  for operand 0']
    #allocation2 [shape = 'u8[4096]{0}', space=vmem, size = 0x1000, scoped, tag = 'operand span for operand 1']
    #allocation3 [shape = 'u8[2048]{0}', space=vmem, size = 0x800, scoped, tag = 'packed  for operand 1']
    #allocation4 [shape = 'u8[4096]{0}', space=vmem, size = 0x1000, scoped, tag = 'operand span for operand 2']
    #allocation5 [shape = 'u8[512]{0}', space=vmem, size = 0x400, scoped, tag = 'packed  for operand 2']
    #allocation6 [shape = 's32[1]{0}', space=sflag, size = 0x4, scoped, tag = 'scoped memory for custom-call.11']
    #allocation7 [shape = 'u8[4096]{0}', space=vmem, size = 0x1000, scoped, tag = 'operand span for operand 3']
    #allocation8 [shape = 'u8[512]{0}', space=vmem, size = 0x400, scoped, tag = 'packed  for operand 3']
    #allocation9 [shape = 's32[3,128]{1,0}', space=vmem, size = 0x1000, scoped, tag = 'scratch for permutations']
    %5 = vsyncpa [#allocation6], 0
    %p7 = scmp.gt.s32.totalorder 4, 0
    // Predicated region
    $region2: #{custom-call.11} parent=1 // pred_check
      %p8 = pneg %p7
    $region3: #{custom-call.11} parent=1 // pred_check_branch
      %10 = sbr.rel (%p8) target = $region5
    $region4: #{custom-call.11} parent=1 // pred_region
      %s11 = sshra.s32 4, 3
      %p12 = scmp.gt.s32.totalorder %s11, 0
      // Predicated region
      $region6: #{custom-call.11} parent=4 // pred_check
        %p13 = pneg %p12
      $region7: #{custom-call.11} parent=4 // pred_check_branch
        %15 = sbr.rel (%p13) target = $region9
      $region8: #{custom-call.11} parent=4 // pred_region
        %s16 = ssub.s32 %s11, 1
        %s17 = smul.u32 %s16, 128
        %s18 = sshra.s32 %s17, 4
        %s19 = scalar_lea.vmem %s0, %s18
        %v20 = vld [vmem:[%s0] sm:$0xff]
        // While loop
        $region10: #{custom-call.11} parent=8 // loop_pre_header
          _
        $region11: #{custom-call.11} parent=8 // loop_header
          %s21 = sphi %s0, %s43
          %s22 = sphi [#allocation1], %s44
          %v23 = vphi %v20, %v45
          %s24 = ssub.s32 %s19, 64
          %p25 = scmp.gt.s32.totalorder %s21, %s24
        $region12: #{custom-call.11} parent=8 // loop_header_branch
          %27 = sbr.rel (%p25) target = $region16
        $region13: #{custom-call.11} parent=8 // loop_body
          %28 = vst [vmem:[%s22] sm:$0xff] %v23
          %v29 = vld [vmem:[%s21 + $0x8] sm:$0xff]
          %30 = vst [vmem:[%s22 + $0x8] sm:$0xff] %v29
          %v31 = vld [vmem:[%s21 + $0x10] sm:$0xff]
          %32 = vst [vmem:[%s22 + $0x10] sm:$0xff] %v31
          %v33 = vld [vmem:[%s21 + $0x18] sm:$0xff]
          %34 = vst [vmem:[%s22 + $0x18] sm:$0xff] %v33
          %v35 = vld [vmem:[%s21 + $0x20] sm:$0xff]
          %36 = vst [vmem:[%s22 + $0x20] sm:$0xff] %v35
          %v37 = vld [vmem:[%s21 + $0x28] sm:$0xff]
          %38 = vst [vmem:[%s22 + $0x28] sm:$0xff] %v37
          %v39 = vld [vmem:[%s21 + $0x30] sm:$0xff]
          %40 = vst [vmem:[%s22 + $0x30] sm:$0xff] %v39
          %v41 = vld [vmem:[%s21 + $0x38] sm:$0xff]
          %42 = vst [vmem:[%s22 + $0x38] sm:$0xff] %v41
        $region14: #{custom-call.11} parent=8 // loop_footer
          %s43 = scalar_lea.vmem %s21, 64
          %s44 = scalar_lea.vmem %s22, 64
          %v45 = vld [vmem:[%s21 + $0x40] sm:$0xff]
        $region15: #{custom-call.11} parent=8 // loop_footer_branch
          %46 = sbr.rel target = $region11
        $region16: #{custom-call.11} parent=8 // loop_exit
          _
        // While loop
        $region17: #{custom-call.11} parent=8 // loop_pre_header
          _
        $region18: #{custom-call.11} parent=8 // loop_header
          %s47 = sphi %s21, %s55
          %s48 = sphi %s22, %s56
          %v49 = vphi %v23, %v49
          %p50 = scmp.gt.s32.totalorder %s47, %s19
        $region19: #{custom-call.11} parent=8 // loop_header_branch
          %52 = sbr.rel (%p50) target = $region23
        $region20: #{custom-call.11} parent=8 // loop_body
          %v53 = vld [vmem:[%s47] sm:$0xff]
          %54 = vst [vmem:[%s48] sm:$0xff] %v53
        $region21: #{custom-call.11} parent=8 // loop_footer
          %s55 = scalar_lea.vmem %s47, 8
          %s56 = scalar_lea.vmem %s48, 8
        $region22: #{custom-call.11} parent=8 // loop_footer_branch
          %57 = sbr.rel target = $region18
        $region23: #{custom-call.11} parent=8 // loop_exit
          _
      $region9: #{custom-call.11} parent=4 // pred_fallthru
        _
      %s58 = sand.u32 4, 7
      %s59 = sshllo.u32 0, %s58
      %s60 = smul.u32 %s11, 128
      %s61 = sshra.s32 %s60, 4
      %s62 = scalar_lea.vmem [#allocation1], %s61
      %s63 = smul.u32 %s11, 128
      %s64 = sshra.s32 %s63, 4
      %s65 = scalar_lea.vmem %s0, %s64
      %v66 = vld [vmem:[%s65] sm:%s59]
      %67 = vst [vmem:[%s62] sm:%s59] %v66
    $region5: #{custom-call.11} parent=1 // pred_fallthru
      _
    %s69 = sshllo.u32 0, 4
    %v70 = vld [vmem:[#allocation1] sm:%s69]
    %71 = vst [vmem:[#allocation0] sm:%s69] %v70
    %v72 = vld [vmem:[#allocation0] sm:$0xff]
    %73 = vst [vmem:[#allocation2] sm:$0xff] %v72
    %74 = vst [vmem:[#allocation4] sm:$0x1] 0
    %v75 = vlaneseq
    %v76 = vshrl.u32 %v75, 7
    %v77 = vmov %v76
    %79 = vst [vmem:[#allocation9] sm:$0xff] %v77
    loop: start=0, step=1, limit=3
    $region25: #{custom-call.11} parent=1 // loop_pre_header
      _
    $region26: #{custom-call.11} parent=1 // loop_header
      %s81 = sphi 0, %s85
      %p82 = scmp.ge.s32.totalorder %s81, 3
    $region27: #{custom-call.11} parent=1 // loop_header_branch
      %84 = sbr.rel (%p82) target = $region31
    $region28: #{custom-call.11} parent=1 // loop_body
      %v86 = vstv %s81
      %v87 = vlaneseq
      %v88 = vshrl.u32 %v87, 7
      %v89 = vmov %v88
      %v90 = vld [vmem:[#allocation2] sm:$0xff]
      %v91 = vand.u32 2147483647, %v90
      %v93 = vstv %s81
      %vm94 = vcmp.ge.s32.totalorder %v89, %v93
      %vm95 = vcmp.lt.s32.totalorder %v89, 3
      %vm96 = vmand %vm94, %vm95
      %vm97 = vcmp.lt.f32.partialorder -inf, %v91
      %vm98 = vmand %vm96, %vm97
      %v99 = vsel %vm98, %v89, %v86
      %v100 = vsel %vm98, %v91, -inf
      %v101 = vrot.slane %v100, 1
      %v102 = vrot.slane %v99, 1
      %vm103 = vcmp.ge.f32.partialorder %v101, %v100
      %v104 = vsel %vm103, %v101, %v100
      %v105 = vsel %vm103, %v102, %v99
      %v106 = vrot.slane %v101, 1
      %v107 = vrot.slane %v102, 1
      %vm108 = vcmp.ge.f32.partialorder %v106, %v104
      %v109 = vsel %vm108, %v106, %v104
      %v110 = vsel %vm108, %v107, %v105
      %v111 = vrot.slane %v106, 1
      %v112 = vrot.slane %v107, 1
      %vm113 = vcmp.ge.f32.partialorder %v111, %v109
      %v114 = vsel %vm113, %v111, %v109
      %v115 = vsel %vm113, %v112, %v110
      %v116 = vrot.slane %v111, 1
      %v117 = vrot.slane %v112, 1
      %vm118 = vcmp.ge.f32.partialorder %v116, %v114
      %v119 = vsel %vm118, %v116, %v114
      %v120 = vsel %vm118, %v117, %v115
      %v121 = vrot.slane %v116, 1
      %v122 = vrot.slane %v117, 1
      %vm123 = vcmp.ge.f32.partialorder %v121, %v119
      %v124 = vsel %vm123, %v121, %v119
      %v125 = vsel %vm123, %v122, %v120
      %v126 = vrot.slane %v121, 1
      %v127 = vrot.slane %v122, 1
      %vm128 = vcmp.ge.f32.partialorder %v126, %v124
      %v129 = vsel %vm128, %v126, %v124
      %v130 = vsel %vm128, %v127, %v125
      %v131 = vrot.slane %v126, 1
      %v132 = vrot.slane %v127, 1
      %vm133 = vcmp.ge.f32.partialorder %v131, %v129
      %v134 = vsel %vm133, %v131, %v129
      %v135 = vsel %vm133, %v132, %v130
      %s136 = ssub.s32 128, %s81
      %137 = vrot.lane.b32.xlu0 %v135, %s136
      %v138 = vpop.permute.xlu0 %137
      %s139 = vtos %v138
      %v140 = vstv %s81
      %v141 = vlaneseq
      %v142 = vand.u32 %v141, 127
      %vm143 = vcmp.eq.s32.totalorder %v142, %v140
      %v144 = vstv %s139
      %v145 = vld [vmem:[#allocation4] ss:$0 sm:$0xff]
      %v146 = vsel %vm143, %v144, %v145
      %147 = vst [vmem:[#allocation4] sm:$0x1] %v146
      %s148 = scalar_lea.vmem [#allocation2], %s81
      %s149 = scalar_lea.vmem [#allocation2], %s139
      %v150 = vld [vmem:[%s148] ss:$0 sm:$0xff]
      %v151 = vld [vmem:[%s149] ss:$0 sm:$0xff]
      %152 = vst [vmem:[%s149] sm:$0x1] %v150
      %153 = vst [vmem:[%s148] sm:$0x1] %v151
      %s154 = scalar_lea.vmem [#allocation9], %s81
      %s155 = scalar_lea.vmem [#allocation9], %s139
      %v156 = vld [vmem:[%s154] ss:$0 sm:$0xff]
      %v157 = vld [vmem:[%s155] ss:$0 sm:$0xff]
      %158 = vst [vmem:[%s155] sm:$0x1] %v156
      %159 = vst [vmem:[%s154] sm:$0x1] %v157
      %vm160 = vcmp.ne.f32.partialorder %v151, 0.0
      %vm161 = vmand %vm143, %vm160
      %v162 = vsel %vm161, %v151, 1.0
      %v163 = vlaneseq
      %v164 = vand.u32 %v163, 127
      %v165 = vstv %s81
      %vm166 = vcmp.gt.s32.totalorder %v164, %v165
      %v167 = vsel %vm166, %v151, 0.0
      %v168 = vlaneseq
      %v169 = vshrl.u32 %v168, 7
      %v170 = vmov %v169
      %v171 = vld [vmem:[#allocation2] sm:$0xff]
      %v173 = vstv %s81
      %vm174 = vcmp.gt.s32.totalorder %v170, %v173
      %v175 = vsel %vm174, %v162, 1.0
      %v176 = vrcp.pop %v175
      %v177 = vmul.f32 %v171, %v176
      %vm178 = vmand %vm174, %vm143
      %v179 = vsel %vm178, %v177, 0.0
      %180 = vadd.xlane.f32.xlu0 %v179
      %v181 = vpop.xlane.xlu0 %180
      %v182 = vmul.f32 %v181, %v167
      %v183 = vsub.f32 %v177, %v182
      %184 = vst [vmem:[#allocation2] sm:$0xff] %v183
    $region29: #{custom-call.11} parent=1 // loop_footer
      %s85 = sadd.s32 1, %s81
    $region30: #{custom-call.11} parent=1 // loop_footer_branch
      %80 = sbr.rel target = $region26
    $region31: #{custom-call.11} parent=1 // loop_exit
      _
    %v185 = vld [vmem:[#allocation9] sm:$0xff]
    %s186 = scalar_lea.vmem [#allocation9], 8
    %s187 = scalar_lea.vmem [#allocation9], 16
    %s188 = scalar_lea.vmem [#allocation9], 24
    %s189 = scalar_lea.vmem [#allocation9], 32
    %s190 = scalar_lea.vmem [#allocation9], 40
    %s191 = scalar_lea.vmem [#allocation9], 48
    %s192 = scalar_lea.vmem [#allocation9], 56
    %s193 = scalar_lea.vmem [#allocation9], 64
    %s194 = scalar_lea.vmem [#allocation9], 72
    %s195 = scalar_lea.vmem [#allocation9], 80
    %s196 = scalar_lea.vmem [#allocation9], 88
    %s197 = scalar_lea.vmem [#allocation9], 96
    %s198 = scalar_lea.vmem [#allocation9], 104
    %s199 = scalar_lea.vmem [#allocation9], 112
    %s200 = scalar_lea.vmem [#allocation9], 120
    %201 = vxpose.xlu0.b32.start [1/16] %v185, 128
    %202 = vxpose.xlu0.b32.cont [2/16] 0, 128
    %203 = vxpose.xlu0.b32.cont [3/16] 0, 128
    %204 = vxpose.xlu0.b32.cont [4/16] 0, 128
    %205 = vxpose.xlu0.b32.cont [5/16] 0, 128
    %206 = vxpose.xlu0.b32.cont [6/16] 0, 128
    %207 = vxpose.xlu0.b32.cont [7/16] 0, 128
    %208 = vxpose.xlu0.b32.cont [8/16] 0, 128
    %209 = vxpose.xlu0.b32.cont [9/16] 0, 128
    %210 = vxpose.xlu0.b32.cont [10/16] 0, 128
    %211 = vxpose.xlu0.b32.cont [11/16] 0, 128
    %212 = vxpose.xlu0.b32.cont [12/16] 0, 128
    %213 = vxpose.xlu0.b32.cont [13/16] 0, 128
    %214 = vxpose.xlu0.b32.cont [14/16] 0, 128
    %215 = vxpose.xlu0.b32.cont [15/16] 0, 128
    %216 = vxpose.xlu0.b32.end [16/16] 0, 128
    %v217 = vpop.trf.xlu0
    %v218 = vpop.trf.xlu0
    %v219 = vpop.trf.xlu0
    %v220 = vpop.trf.xlu0
    %v221 = vpop.trf.xlu0
    %v222 = vpop.trf.xlu0
    %v223 = vpop.trf.xlu0
    %v224 = vpop.trf.xlu0
    %v225 = vpop.trf.xlu0
    %v226 = vpop.trf.xlu0
    %v227 = vpop.trf.xlu0
    %v228 = vpop.trf.xlu0
    %v229 = vpop.trf.xlu0
    %v230 = vpop.trf.xlu0
    %v231 = vpop.trf.xlu0
    %v232 = vpop.trf.xlu0
    %233 = vst [vmem:[#allocation7] sm:$0x1] %v217
    %s235 = sshllo.u32 0, 4
    %v237 = vld [vmem:[#allocation2] sm:%s235]
    %s238 = sshllo.u32 0, 4
    %239 = vst [vmem:[#allocation3] sm:%s238] %v237
    %s241 = sshllo.u32 0, 1
    %v243 = vld [vmem:[#allocation4] sm:%s241]
    %s244 = sshllo.u32 0, 1
    %245 = vst [vmem:[#allocation5] sm:%s244] %v243
    %s247 = sshllo.u32 0, 1
    %v249 = vld [vmem:[#allocation7] sm:%s247]
    %s250 = sshllo.u32 0, 1
    %251 = vst [vmem:[#allocation8] sm:%s250] %v249
    %p253 = scmp.gt.s32.totalorder 4, 0
    // Predicated region
    $region32: #{custom-call.11} parent=1 // pred_check
      %p254 = pneg %p253
    $region33: #{custom-call.11} parent=1 // pred_check_branch
      %256 = sbr.rel (%p254) target = $region35
    $region34: #{custom-call.11} parent=1 // pred_region
      %s257 = sshra.s32 4, 3
      %p258 = scmp.gt.s32.totalorder %s257, 0
      // Predicated region
      $region36: #{custom-call.11} parent=34 // pred_check
        %p259 = pneg %p258
      $region37: #{custom-call.11} parent=34 // pred_check_branch
        %261 = sbr.rel (%p259) target = $region39
      $region38: #{custom-call.11} parent=34 // pred_region
        %s262 = ssub.s32 %s257, 1
        %s263 = smul.u32 %s262, 128
        %s264 = sshra.s32 %s263, 4
        %s265 = scalar_lea.vmem [#allocation3], %s264
        %v266 = vld [vmem:[#allocation3] sm:$0xff]
        // While loop
        $region40: #{custom-call.11} parent=38 // loop_pre_header
          _
        $region41: #{custom-call.11} parent=38 // loop_header
          %s267 = sphi [#allocation3], %s289
          %s268 = sphi %s1, %s290
          %v269 = vphi %v266, %v291
          %s270 = ssub.s32 %s265, 64
          %p271 = scmp.gt.s32.totalorder %s267, %s270
        $region42: #{custom-call.11} parent=38 // loop_header_branch
          %273 = sbr.rel (%p271) target = $region46
        $region43: #{custom-call.11} parent=38 // loop_body
          %274 = vst [vmem:[%s268] sm:$0xff] %v269
          %v275 = vld [vmem:[%s267 + $0x8] sm:$0xff]
          %276 = vst [vmem:[%s268 + $0x8] sm:$0xff] %v275
          %v277 = vld [vmem:[%s267 + $0x10] sm:$0xff]
          %278 = vst [vmem:[%s268 + $0x10] sm:$0xff] %v277
          %v279 = vld [vmem:[%s267 + $0x18] sm:$0xff]
          %280 = vst [vmem:[%s268 + $0x18] sm:$0xff] %v279
          %v281 = vld [vmem:[%s267 + $0x20] sm:$0xff]
          %282 = vst [vmem:[%s268 + $0x20] sm:$0xff] %v281
          %v283 = vld [vmem:[%s267 + $0x28] sm:$0xff]
          %284 = vst [vmem:[%s268 + $0x28] sm:$0xff] %v283
          %v285 = vld [vmem:[%s267 + $0x30] sm:$0xff]
          %286 = vst [vmem:[%s268 + $0x30] sm:$0xff] %v285
          %v287 = vld [vmem:[%s267 + $0x38] sm:$0xff]
          %288 = vst [vmem:[%s268 + $0x38] sm:$0xff] %v287
        $region44: #{custom-call.11} parent=38 // loop_footer
          %s289 = scalar_lea.vmem %s267, 64
          %s290 = scalar_lea.vmem %s268, 64
          %v291 = vld [vmem:[%s267 + $0x40] sm:$0xff]
        $region45: #{custom-call.11} parent=38 // loop_footer_branch
          %292 = sbr.rel target = $region41
        $region46: #{custom-call.11} parent=38 // loop_exit
          _
        // While loop
        $region47: #{custom-call.11} parent=38 // loop_pre_header
          _
        $region48: #{custom-call.11} parent=38 // loop_header
          %s293 = sphi %s267, %s301
          %s294 = sphi %s268, %s302
          %v295 = vphi %v269, %v295
          %p296 = scmp.gt.s32.totalorder %s293, %s265
        $region49: #{custom-call.11} parent=38 // loop_header_branch
          %298 = sbr.rel (%p296) target = $region53
        $region50: #{custom-call.11} parent=38 // loop_body
          %v299 = vld [vmem:[%s293] sm:$0xff]
          %300 = vst [vmem:[%s294] sm:$0xff] %v299
        $region51: #{custom-call.11} parent=38 // loop_footer
          %s301 = scalar_lea.vmem %s293, 8
          %s302 = scalar_lea.vmem %s294, 8
        $region52: #{custom-call.11} parent=38 // loop_footer_branch
          %303 = sbr.rel target = $region48
        $region53: #{custom-call.11} parent=38 // loop_exit
          _
      $region39: #{custom-call.11} parent=34 // pred_fallthru
        _
      %s304 = sand.u32 4, 7
      %s305 = sshllo.u32 0, %s304
      %s306 = smul.u32 %s257, 128
      %s307 = sshra.s32 %s306, 4
      %s308 = scalar_lea.vmem %s1, %s307
      %s309 = smul.u32 %s257, 128
      %s310 = sshra.s32 %s309, 4
      %s311 = scalar_lea.vmem [#allocation3], %s310
      %v312 = vld [vmem:[%s311] sm:%s305]
      %313 = vst [vmem:[%s308] sm:%s305] %v312
    $region35: #{custom-call.11} parent=1 // pred_fallthru
      _
    // Predicated region
    $region54: #{custom-call.11} parent=1 // pred_check
      _
    $region55: #{custom-call.11} parent=1 // pred_check_branch
      %315 = sbr.rel (0) target = $region57
    $region56: #{custom-call.11} parent=1 // pred_region
      %s317 = ssub.s32 16, 16
      %318 = vsyncadd [#allocation6], %s317
      %s319 = sshll.u32 [#allocation5], 4
      %s320 = int_to_ptr.vmem [resolvable:$true] %s319
      %322 = dma.vmem_to_hbm [thread:$0]  %s320, 16, %s2, [#allocation6]
    $region57: #{custom-call.11} parent=1 // pred_fallthru
      _
    // Predicated region
    $region58: #{custom-call.11} parent=1 // pred_check
      _
    $region59: #{custom-call.11} parent=1 // pred_check_branch
      %324 = sbr.rel (0) target = $region61
    $region60: #{custom-call.11} parent=1 // pred_region
      %p326 = scmp.gt.s32.totalorder 1, 0
      // Predicated region
      $region62: #{custom-call.11} parent=60 // pred_check
        %p327 = pneg %p326
      $region63: #{custom-call.11} parent=60 // pred_check_branch
        %329 = sbr.rel (%p327) target = $region65
      $region64: #{custom-call.11} parent=60 // pred_region
        %s330 = sshra.s32 1, 3
        %p331 = scmp.gt.s32.totalorder %s330, 0
        // Predicated region
        $region66: #{custom-call.11} parent=64 // pred_check
          %p332 = pneg %p331
        $region67: #{custom-call.11} parent=64 // pred_check_branch
          %334 = sbr.rel (%p332) target = $region69
        $region68: #{custom-call.11} parent=64 // pred_region
          %s335 = ssub.s32 %s330, 1
          %s336 = smul.u32 %s335, 128
          %s337 = sshra.s32 %s336, 4
          %s338 = scalar_lea.vmem [#allocation8], %s337
          %v339 = vld [vmem:[#allocation8] sm:$0xff]
          // While loop
          $region70: #{custom-call.11} parent=68 // loop_pre_header
            _
          $region71: #{custom-call.11} parent=68 // loop_header
            %s340 = sphi [#allocation8], %s362
            %s341 = sphi %s3, %s363
            %v342 = vphi %v339, %v364
            %s343 = ssub.s32 %s338, 64
            %p344 = scmp.gt.s32.totalorder %s340, %s343
          $region72: #{custom-call.11} parent=68 // loop_header_branch
            %346 = sbr.rel (%p344) target = $region76
          $region73: #{custom-call.11} parent=68 // loop_body
            %347 = vst [vmem:[%s341] sm:$0xff] %v342
            %v348 = vld [vmem:[%s340 + $0x8] sm:$0xff]
            %349 = vst [vmem:[%s341 + $0x8] sm:$0xff] %v348
            %v350 = vld [vmem:[%s340 + $0x10] sm:$0xff]
            %351 = vst [vmem:[%s341 + $0x10] sm:$0xff] %v350
            %v352 = vld [vmem:[%s340 + $0x18] sm:$0xff]
            %353 = vst [vmem:[%s341 + $0x18] sm:$0xff] %v352
            %v354 = vld [vmem:[%s340 + $0x20] sm:$0xff]
            %355 = vst [vmem:[%s341 + $0x20] sm:$0xff] %v354
            %v356 = vld [vmem:[%s340 + $0x28] sm:$0xff]
            %357 = vst [vmem:[%s341 + $0x28] sm:$0xff] %v356
            %v358 = vld [vmem:[%s340 + $0x30] sm:$0xff]
            %359 = vst [vmem:[%s341 + $0x30] sm:$0xff] %v358
            %v360 = vld [vmem:[%s340 + $0x38] sm:$0xff]
            %361 = vst [vmem:[%s341 + $0x38] sm:$0xff] %v360
          $region74: #{custom-call.11} parent=68 // loop_footer
            %s362 = scalar_lea.vmem %s340, 64
            %s363 = scalar_lea.vmem %s341, 64
            %v364 = vld [vmem:[%s340 + $0x40] sm:$0xff]
          $region75: #{custom-call.11} parent=68 // loop_footer_branch
            %365 = sbr.rel target = $region71
          $region76: #{custom-call.11} parent=68 // loop_exit
            _
          // While loop
          $region77: #{custom-call.11} parent=68 // loop_pre_header
            _
          $region78: #{custom-call.11} parent=68 // loop_header
            %s366 = sphi %s340, %s374
            %s367 = sphi %s341, %s375
            %v368 = vphi %v342, %v368
            %p369 = scmp.gt.s32.totalorder %s366, %s338
          $region79: #{custom-call.11} parent=68 // loop_header_branch
            %371 = sbr.rel (%p369) target = $region83
          $region80: #{custom-call.11} parent=68 // loop_body
            %v372 = vld [vmem:[%s366] sm:$0xff]
            %373 = vst [vmem:[%s367] sm:$0xff] %v372
          $region81: #{custom-call.11} parent=68 // loop_footer
            %s374 = scalar_lea.vmem %s366, 8
            %s375 = scalar_lea.vmem %s367, 8
          $region82: #{custom-call.11} parent=68 // loop_footer_branch
            %376 = sbr.rel target = $region78
          $region83: #{custom-call.11} parent=68 // loop_exit
            _
        $region69: #{custom-call.11} parent=64 // pred_fallthru
          _
        %s377 = sand.u32 1, 7
        %s378 = sshllo.u32 0, %s377
        %s379 = smul.u32 %s330, 128
        %s380 = sshra.s32 %s379, 4
        %s381 = scalar_lea.vmem %s3, %s380
        %s382 = smul.u32 %s330, 128
        %s383 = sshra.s32 %s382, 4
        %s384 = scalar_lea.vmem [#allocation8], %s383
        %v385 = vld [vmem:[%s384] sm:%s378]
        %386 = vst [vmem:[%s381] sm:%s378] %v385
      $region65: #{custom-call.11} parent=60 // pred_fallthru
        _
    $region61: #{custom-call.11} parent=1 // pred_fallthru
      _
    // Predicated region
    $region84: #{custom-call.11} parent=1 // pred_check
      _
    $region85: #{custom-call.11} parent=1 // pred_check_branch
      %388 = sbr.rel (0) target = $region87
    $region86: #{custom-call.11} parent=1 // pred_region
      %389 = dma.done [#allocation6], 16
    $region87: #{custom-call.11} parent=1 // pred_fallthru
      _
    // Predicated region
    $region88: #{custom-call.11} parent=1 // pred_check
      _
    $region89: #{custom-call.11} parent=1 // pred_check_branch
      %391 = sbr.rel (0) target = $region91
    $region90: #{custom-call.11} parent=1 // pred_region
      _
    $region91: #{custom-call.11} parent=1 // pred_fallthru
      _
    %392 = vsyncpa [#allocation6], 1

// kernel: custom-call.13
$region0: #{custom-call.13}
  %s0 = inlined_call_operand.vmem [shape: f32[1,3,3], index: 0, kind: input, shape index: {}]
  %s1 = inlined_call_operand.vmem [shape: f32[1,3,3], index: 1, kind: output, shape index: {}]
  $region1: #{custom-call.13} parent=0
    #allocation0 [shape = 'u8[4096]{0}', space=vmem, size = 0x1000, scoped, tag = 'operand span for operand 0']
    #allocation1 [shape = 'u8[2048]{0}', space=vmem, size = 0x800, scoped, tag = 'packed  for operand 0']
    #allocation2 [shape = 'u8[4096]{0}', space=vmem, size = 0x1000, scoped, tag = 'operand span for operand 1']
    #allocation3 [shape = 'u8[2048]{0}', space=vmem, size = 0x800, scoped, tag = 'packed  for operand 1']
    #allocation4 [shape = 'f32[3,3]{1,0}', space=vmem, size = 0x1000, scoped, tag = 'rescaled input a']
    // Predicated region
    $region2: #{custom-call.13} parent=1 // pred_check
      _
    $region3: #{custom-call.13} parent=1 // pred_check_branch
      %3 = sbr.rel (0) target = $region5
    $region4: #{custom-call.13} parent=1 // pred_region
      // Predicated region
      $region6: #{custom-call.13} parent=4 // pred_check
        _
      $region7: #{custom-call.13} parent=4 // pred_check_branch
        %5 = sbr.rel target = $region9
      $region8: #{custom-call.13} parent=4 // pred_region
        // Predicated region
        $region21: #{custom-call.13} parent=8 // pred_check
          _
        $region22: #{custom-call.13} parent=8 // pred_check_branch
          %20 = sbr.rel (0) target = $region24
        $region23: #{custom-call.13} parent=8 // pred_region
          loop: start=0, step=1, limit=1
          $region25: #{custom-call.13} parent=23 // loop_pre_header
            _
          $region26: #{custom-call.13} parent=23 // loop_header
            %s23 = sphi 0, %s27
            %p24 = scmp.ge.s32.totalorder %s23, 1
            %s28 = sphi %s0, %s0
            %s29 = sphi [#allocation1], [#allocation1]
          $region27: #{custom-call.13} parent=23 // loop_header_branch
            %26 = sbr.rel (%p24) target = $region31
          $region28: #{custom-call.13} parent=23 // loop_body
            %v30 = vld [vmem:[%s28] sm:$0xf]
            %31 = vst [vmem:[%s29] sm:$0xf] %v30
          $region29: #{custom-call.13} parent=23 // loop_footer
            %s27 = sadd.s32 1, %s23
          $region30: #{custom-call.13} parent=23 // loop_footer_branch
            %22 = sbr.rel target = $region26
          $region31: #{custom-call.13} parent=23 // loop_exit
            _
        $region24: #{custom-call.13} parent=8 // pred_fallthru
          _
      $region9: #{custom-call.13} parent=4 // pred_fallthru
        _
      // Predicated region
      $region10: #{custom-call.13} parent=4 // pred_check
        _
      $region11: #{custom-call.13} parent=4 // pred_check_branch
        %7 = sbr.rel (0) target = $region13
      $region12: #{custom-call.13} parent=4 // pred_region
        loop: start=0, step=1, limit=1
        $region14: #{custom-call.13} parent=12 // loop_pre_header
          _
        $region15: #{custom-call.13} parent=12 // loop_header
          %s10 = sphi 0, %s14
          %p11 = scmp.ge.s32.totalorder %s10, 1
          %s15 = sphi %s0, %s0
          %s16 = sphi [#allocation1], [#allocation1]
        $region16: #{custom-call.13} parent=12 // loop_header_branch
          %13 = sbr.rel (%p11) target = $region20
        $region17: #{custom-call.13} parent=12 // loop_body
          %v17 = vld [vmem:[%s15] sm:$0xf]
          %18 = vst [vmem:[%s16] sm:$0xf] %v17
        $region18: #{custom-call.13} parent=12 // loop_footer
          %s14 = sadd.s32 1, %s10
        $region19: #{custom-call.13} parent=12 // loop_footer_branch
          %9 = sbr.rel target = $region15
        $region20: #{custom-call.13} parent=12 // loop_exit
          _
      $region13: #{custom-call.13} parent=4 // pred_fallthru
        _
    $region5: #{custom-call.13} parent=1 // pred_fallthru
      _
    %32 = vnop
    %s34 = sshllo.u32 0, 4
    %v35 = vld [vmem:[#allocation1] sm:%s34]
    %36 = vst [vmem:[#allocation0] sm:%s34] %v35
    %v37 = vlaneseq
    %v38 = vand.u32 %v37, 127
    %vm39 = vcmp.lt.s32.totalorder %v38, 3
    %v40 = vlaneseq
    %v41 = vshrl.u32 %v40, 7
    %vm43 = vcmp.eq.s32.totalorder %v41, %v38
    %v44 = vld [vmem:[#allocation0] sm:$0xff]
    %v45 = vsel %vm43, %v44, 0.0
    %46 = vadd.xlane.f32.xlu0 %v45
    %v47 = vpop.xlane.xlu0 %46
    %vm48 = vcmp.ge.s32.totalorder %v41, %v38
    %vm49 = vmand %vm48, %vm39
    %v50 = vsel %vm49, %v44, 0.0
    %v51 = vrcp.pop %v47
    %v52 = vmul.f32 %v50, %v51
    %53 = vst [vmem:[#allocation4] sm:$0xff] %v52
    %v54 = vlaneseq
    %v55 = vand.u32 %v54, 127
    %v56 = vlaneseq
    %v57 = vshrl.u32 %v56, 7
    %vm59 = vcmp.eq.s32.totalorder %v55, %v57
    %v60 = vlaneseq
    %v61 = vand.u32 %v60, 127
    %vm62 = vcmp.eq.s32.totalorder %v61, 0
    %v63 = vsel %vm62, 1.0, -1.0
    %v64 = vsel %vm59, %v63, 0.0
    %s65 = scalar_lea.vmem [#allocation4], 1
    %v66 = vld [vmem:[%s65] ss:$0 sm:$0xff]
    %v67 = vxor.u32 %v66, 2147483648
    %v68 = vlaneseq
    %v69 = vand.u32 %v68, 127
    %vm70 = vcmp.eq.s32.totalorder %v69, 1
    %v71 = vmul.f32 %v67, %v64
    %72 = vadd.xlane.f32.xlu0 %v71
    %v73 = vpop.xlane.xlu0 %72
    %v74 = vsel %vm70, %v73, %v64
    %s75 = scalar_lea.vmem [#allocation4], 2
    %v76 = vld [vmem:[%s75] ss:$0 sm:$0xff]
    %v77 = vxor.u32 %v76, 2147483648
    %v78 = vlaneseq
    %v79 = vand.u32 %v78, 127
    %vm80 = vcmp.eq.s32.totalorder %v79, 2
    %v81 = vmul.f32 %v77, %v74
    %82 = vadd.xlane.f32.xlu0 %v81
    %v83 = vpop.xlane.xlu0 %82
    %v84 = vsel %vm80, %v83, %v74
    %v85 = vrcp.pop %v47
    %v86 = vmul.f32 %v84, %v85
    %vm87 = vweird.f32 %v47
    %v88 = vsel %vm87, %v84, %v86
    %89 = vst [vmem:[#allocation2] sm:$0xff] %v88
    %s91 = sshllo.u32 0, 4
    %v93 = vld [vmem:[#allocation2] sm:%s91]
    %s94 = sshllo.u32 0, 4
    %95 = vst [vmem:[#allocation3] sm:%s94] %v93
    // Predicated region
    $region32: #{custom-call.13} parent=1 // pred_check
      _
    $region33: #{custom-call.13} parent=1 // pred_check_branch
      %97 = sbr.rel (0) target = $region35
    $region34: #{custom-call.13} parent=1 // pred_region
      // Predicated region
      $region36: #{custom-call.13} parent=34 // pred_check
        _
      $region37: #{custom-call.13} parent=34 // pred_check_branch
        %99 = sbr.rel target = $region39
      $region38: #{custom-call.13} parent=34 // pred_region
        // Predicated region
        $region51: #{custom-call.13} parent=38 // pred_check
          _
        $region52: #{custom-call.13} parent=38 // pred_check_branch
          %114 = sbr.rel (0) target = $region54
        $region53: #{custom-call.13} parent=38 // pred_region
          loop: start=0, step=1, limit=1
          $region55: #{custom-call.13} parent=53 // loop_pre_header
            _
          $region56: #{custom-call.13} parent=53 // loop_header
            %s117 = sphi 0, %s121
            %p118 = scmp.ge.s32.totalorder %s117, 1
            %s122 = sphi [#allocation3], [#allocation3]
            %s123 = sphi %s1, %s1
          $region57: #{custom-call.13} parent=53 // loop_header_branch
            %120 = sbr.rel (%p118) target = $region61
          $region58: #{custom-call.13} parent=53 // loop_body
            %v124 = vld [vmem:[%s122] sm:$0xf]
            %125 = vst [vmem:[%s123] sm:$0xf] %v124
          $region59: #{custom-call.13} parent=53 // loop_footer
            %s121 = sadd.s32 1, %s117
          $region60: #{custom-call.13} parent=53 // loop_footer_branch
            %116 = sbr.rel target = $region56
          $region61: #{custom-call.13} parent=53 // loop_exit
            _
        $region54: #{custom-call.13} parent=38 // pred_fallthru
          _
      $region39: #{custom-call.13} parent=34 // pred_fallthru
        _
      // Predicated region
      $region40: #{custom-call.13} parent=34 // pred_check
        _
      $region41: #{custom-call.13} parent=34 // pred_check_branch
        %101 = sbr.rel (0) target = $region43
      $region42: #{custom-call.13} parent=34 // pred_region
        loop: start=0, step=1, limit=1
        $region44: #{custom-call.13} parent=42 // loop_pre_header
          _
        $region45: #{custom-call.13} parent=42 // loop_header
          %s104 = sphi 0, %s108
          %p105 = scmp.ge.s32.totalorder %s104, 1
          %s109 = sphi [#allocation3], [#allocation3]
          %s110 = sphi %s1, %s1
        $region46: #{custom-call.13} parent=42 // loop_header_branch
          %107 = sbr.rel (%p105) target = $region50
        $region47: #{custom-call.13} parent=42 // loop_body
          %v111 = vld [vmem:[%s109] sm:$0xf]
          %112 = vst [vmem:[%s110] sm:$0xf] %v111
        $region48: #{custom-call.13} parent=42 // loop_footer
          %s108 = sadd.s32 1, %s104
        $region49: #{custom-call.13} parent=42 // loop_footer_branch
          %103 = sbr.rel target = $region45
        $region50: #{custom-call.13} parent=42 // loop_exit
          _
      $region43: #{custom-call.13} parent=34 // pred_fallthru
        _
    $region35: #{custom-call.13} parent=1 // pred_fallthru
      _
    %126 = vnop

// kernel: custom-call.12
$region0: #{custom-call.12}
  %s0 = inlined_call_operand.vmem [shape: f32[1,3,3], index: 0, kind: input, shape index: {}]
  %s1 = inlined_call_operand.vmem [shape: f32[1,3,3], index: 1, kind: output, shape index: {}]
  $region1: #{custom-call.12} parent=0
    #allocation0 [shape = 'u8[4096]{0}', space=vmem, size = 0x1000, scoped, tag = 'operand span for operand 0']
    #allocation1 [shape = 'u8[2048]{0}', space=vmem, size = 0x800, scoped, tag = 'packed  for operand 0']
    #allocation2 [shape = 'u8[4096]{0}', space=vmem, size = 0x1000, scoped, tag = 'operand span for operand 1']
    #allocation3 [shape = 'u8[2048]{0}', space=vmem, size = 0x800, scoped, tag = 'packed  for operand 1']
    #allocation4 [shape = 'f32[3,3]{1,0}', space=vmem, size = 0x1000, scoped, tag = 'rescaled input a']
    // Predicated region
    $region2: #{custom-call.12} parent=1 // pred_check
      _
    $region3: #{custom-call.12} parent=1 // pred_check_branch
      %3 = sbr.rel (0) target = $region5
    $region4: #{custom-call.12} parent=1 // pred_region
      // Predicated region
      $region6: #{custom-call.12} parent=4 // pred_check
        _
      $region7: #{custom-call.12} parent=4 // pred_check_branch
        %5 = sbr.rel target = $region9
      $region8: #{custom-call.12} parent=4 // pred_region
        // Predicated region
        $region21: #{custom-call.12} parent=8 // pred_check
          _
        $region22: #{custom-call.12} parent=8 // pred_check_branch
          %20 = sbr.rel (0) target = $region24
        $region23: #{custom-call.12} parent=8 // pred_region
          loop: start=0, step=1, limit=1
          $region25: #{custom-call.12} parent=23 // loop_pre_header
            _
          $region26: #{custom-call.12} parent=23 // loop_header
            %s23 = sphi 0, %s27
            %p24 = scmp.ge.s32.totalorder %s23, 1
            %s28 = sphi %s0, %s0
            %s29 = sphi [#allocation1], [#allocation1]
          $region27: #{custom-call.12} parent=23 // loop_header_branch
            %26 = sbr.rel (%p24) target = $region31
          $region28: #{custom-call.12} parent=23 // loop_body
            %v30 = vld [vmem:[%s28] sm:$0xf]
            %31 = vst [vmem:[%s29] sm:$0xf] %v30
          $region29: #{custom-call.12} parent=23 // loop_footer
            %s27 = sadd.s32 1, %s23
          $region30: #{custom-call.12} parent=23 // loop_footer_branch
            %22 = sbr.rel target = $region26
          $region31: #{custom-call.12} parent=23 // loop_exit
            _
        $region24: #{custom-call.12} parent=8 // pred_fallthru
          _
      $region9: #{custom-call.12} parent=4 // pred_fallthru
        _
      // Predicated region
      $region10: #{custom-call.12} parent=4 // pred_check
        _
      $region11: #{custom-call.12} parent=4 // pred_check_branch
        %7 = sbr.rel (0) target = $region13
      $region12: #{custom-call.12} parent=4 // pred_region
        loop: start=0, step=1, limit=1
        $region14: #{custom-call.12} parent=12 // loop_pre_header
          _
        $region15: #{custom-call.12} parent=12 // loop_header
          %s10 = sphi 0, %s14
          %p11 = scmp.ge.s32.totalorder %s10, 1
          %s15 = sphi %s0, %s0
          %s16 = sphi [#allocation1], [#allocation1]
        $region16: #{custom-call.12} parent=12 // loop_header_branch
          %13 = sbr.rel (%p11) target = $region20
        $region17: #{custom-call.12} parent=12 // loop_body
          %v17 = vld [vmem:[%s15] sm:$0xf]
          %18 = vst [vmem:[%s16] sm:$0xf] %v17
        $region18: #{custom-call.12} parent=12 // loop_footer
          %s14 = sadd.s32 1, %s10
        $region19: #{custom-call.12} parent=12 // loop_footer_branch
          %9 = sbr.rel target = $region15
        $region20: #{custom-call.12} parent=12 // loop_exit
          _
      $region13: #{custom-call.12} parent=4 // pred_fallthru
        _
    $region5: #{custom-call.12} parent=1 // pred_fallthru
      _
    %32 = vnop
    %s34 = sshllo.u32 0, 4
    %v35 = vld [vmem:[#allocation1] sm:%s34]
    %36 = vst [vmem:[#allocation0] sm:%s34] %v35
    %v37 = vlaneseq
    %v38 = vand.u32 %v37, 127
    %vm39 = vcmp.lt.s32.totalorder %v38, 3
    %v40 = vlaneseq
    %v41 = vshrl.u32 %v40, 7
    %vm43 = vcmp.eq.s32.totalorder %v41, %v38
    %v44 = vld [vmem:[#allocation0] sm:$0xff]
    %v45 = vsel %vm43, %v44, 0.0
    %46 = vadd.xlane.f32.xlu0 %v45
    %v47 = vpop.xlane.xlu0 %46
    %vm48 = vcmp.le.s32.totalorder %v41, %v38
    %vm49 = vmand %vm48, %vm39
    %v50 = vsel %vm49, %v44, 0.0
    %v51 = vrcp.pop %v47
    %v52 = vmul.f32 %v50, %v51
    %53 = vst [vmem:[#allocation4] sm:$0xff] %v52
    %v54 = vlaneseq
    %v55 = vand.u32 %v54, 127
    %v56 = vlaneseq
    %v57 = vshrl.u32 %v56, 7
    %vm59 = vcmp.eq.s32.totalorder %v55, %v57
    %v60 = vlaneseq
    %v61 = vand.u32 %v60, 127
    %vm62 = vcmp.eq.s32.totalorder %v61, 2
    %v63 = vsel %vm62, 1.0, -1.0
    %v64 = vsel %vm59, %v63, 0.0
    %s65 = scalar_lea.vmem [#allocation4], 1
    %v66 = vld [vmem:[%s65] ss:$0 sm:$0xff]
    %v67 = vxor.u32 %v66, 2147483648
    %v68 = vlaneseq
    %v69 = vand.u32 %v68, 127
    %vm70 = vcmp.eq.s32.totalorder %v69, 1
    %v71 = vmul.f32 %v67, %v64
    %72 = vadd.xlane.f32.xlu0 %v71
    %v73 = vpop.xlane.xlu0 %72
    %v74 = vsel %vm70, %v73, %v64
    %v75 = vld [vmem:[#allocation4] ss:$0 sm:$0xff]
    %v76 = vxor.u32 %v75, 2147483648
    %v77 = vlaneseq
    %v78 = vand.u32 %v77, 127
    %vm79 = vcmp.eq.s32.totalorder %v78, 0
    %v80 = vmul.f32 %v76, %v74
    %81 = vadd.xlane.f32.xlu0 %v80
    %v82 = vpop.xlane.xlu0 %81
    %v83 = vsel %vm79, %v82, %v74
    %v84 = vrcp.pop %v47
    %v85 = vmul.f32 %v83, %v84
    %vm86 = vweird.f32 %v47
    %v87 = vsel %vm86, %v83, %v85
    %88 = vst [vmem:[#allocation2] sm:$0xff] %v87
    %s90 = sshllo.u32 0, 4
    %v92 = vld [vmem:[#allocation2] sm:%s90]
    %s93 = sshllo.u32 0, 4
    %94 = vst [vmem:[#allocation3] sm:%s93] %v92
    // Predicated region
    $region32: #{custom-call.12} parent=1 // pred_check
      _
    $region33: #{custom-call.12} parent=1 // pred_check_branch
      %96 = sbr.rel (0) target = $region35
    $region34: #{custom-call.12} parent=1 // pred_region
      // Predicated region
      $region36: #{custom-call.12} parent=34 // pred_check
        _
      $region37: #{custom-call.12} parent=34 // pred_check_branch
        %98 = sbr.rel target = $region39
      $region38: #{custom-call.12} parent=34 // pred_region
        // Predicated region
        $region51: #{custom-call.12} parent=38 // pred_check
          _
        $region52: #{custom-call.12} parent=38 // pred_check_branch
          %113 = sbr.rel (0) target = $region54
        $region53: #{custom-call.12} parent=38 // pred_region
          loop: start=0, step=1, limit=1
          $region55: #{custom-call.12} parent=53 // loop_pre_header
            _
          $region56: #{custom-call.12} parent=53 // loop_header
            %s116 = sphi 0, %s120
            %p117 = scmp.ge.s32.totalorder %s116, 1
            %s121 = sphi [#allocation3], [#allocation3]
            %s122 = sphi %s1, %s1
          $region57: #{custom-call.12} parent=53 // loop_header_branch
            %119 = sbr.rel (%p117) target = $region61
          $region58: #{custom-call.12} parent=53 // loop_body
            %v123 = vld [vmem:[%s121] sm:$0xf]
            %124 = vst [vmem:[%s122] sm:$0xf] %v123
          $region59: #{custom-call.12} parent=53 // loop_footer
            %s120 = sadd.s32 1, %s116
          $region60: #{custom-call.12} parent=53 // loop_footer_branch
            %115 = sbr.rel target = $region56
          $region61: #{custom-call.12} parent=53 // loop_exit
            _
        $region54: #{custom-call.12} parent=38 // pred_fallthru
          _
      $region39: #{custom-call.12} parent=34 // pred_fallthru
        _
      // Predicated region
      $region40: #{custom-call.12} parent=34 // pred_check
        _
      $region41: #{custom-call.12} parent=34 // pred_check_branch
        %100 = sbr.rel (0) target = $region43
      $region42: #{custom-call.12} parent=34 // pred_region
        loop: start=0, step=1, limit=1
        $region44: #{custom-call.12} parent=42 // loop_pre_header
          _
        $region45: #{custom-call.12} parent=42 // loop_header
          %s103 = sphi 0, %s107
          %p104 = scmp.ge.s32.totalorder %s103, 1
          %s108 = sphi [#allocation3], [#allocation3]
          %s109 = sphi %s1, %s1
        $region46: #{custom-call.12} parent=42 // loop_header_branch
          %106 = sbr.rel (%p104) target = $region50
        $region47: #{custom-call.12} parent=42 // loop_body
          %v110 = vld [vmem:[%s108] sm:$0xf]
          %111 = vst [vmem:[%s109] sm:$0xf] %v110
        $region48: #{custom-call.12} parent=42 // loop_footer
          %s107 = sadd.s32 1, %s103
        $region49: #{custom-call.12} parent=42 // loop_footer_branch
          %102 = sbr.rel target = $region45
        $region50: #{custom-call.12} parent=42 // loop_exit
          _
      $region43: #{custom-call.12} parent=34 // pred_fallthru
        _
    $region35: #{custom-call.12} parent=1 // pred_fallthru
      _
    %125 = vnop

// kernel: _dense_to_affine_impl.1
$region0: #{_dense_to_affine_impl.1}
  #allocation0 [shape = 'u32[]', space=smem, size = 0x4, offset = 0x4, fixed_abs, tag = 'smem constant byte address 0x4 - core index']
  #allocation1 [shape = 'u32[144,128]{1,0:T(1,128)}', space=vmem, size = 0x12000, scoped, tag = 'internal scratch']
  %s0 = inlined_call_operand.vmem [shape: f32[3,8,768], index: 0, kind: input, shape index: {}]
  %s1 = inlined_call_operand.vmem [shape: f32[3,768], index: 1, kind: output, shape index: {0}]
  %s2 = inlined_call_operand.vmem [shape: f32[3,768], index: 2, kind: output, shape index: {1}]
  %3 = xla_tuple %s1, %s2
  %s4 = sld [smem:[#allocation0]]
  $region26: #{_dense_to_affine_impl.1} parent=0
    _
  %s6 = ssub.s32 1, %s4
  %s7 = scalar_select 0, %s6, %s4
  // Predicated region
  $region2: #{_dense_to_affine_impl.1} parent=0 // pred_check
    _
  $region3: #{_dense_to_affine_impl.1} parent=0 // pred_check_branch
    %9 = sbr.rel (0) target = $region5
  $region4: #{_dense_to_affine_impl.1} parent=0 // pred_region
    _
  $region5: #{_dense_to_affine_impl.1} parent=0 // pred_fallthru
    _
  %p10 = scmp.eq.s32.totalorder 0, 0
  // Predicated region
  $region6: #{_dense_to_affine_impl.1} parent=0 // pred_check
    %p11 = pneg %p10
  $region7: #{_dense_to_affine_impl.1} parent=0 // pred_check_branch
    %13 = sbr.rel (%p11) target = $region9
  $region8: #{_dense_to_affine_impl.1} parent=0 // pred_region
    %14 = vst [vmem:[%s1] sm:$0x77] 0.0
    %15 = vst [vmem:[%s1 + $0x8] sm:$0x77] 0.0
    %16 = vst [vmem:[%s1 + $0x10] sm:$0x77] 0.0
    %17 = vst [vmem:[%s2] sm:$0x77] 0.0
    %18 = vst [vmem:[%s2 + $0x8] sm:$0x77] 0.0
    %19 = vst [vmem:[%s2 + $0x10] sm:$0x77] 0.0
  $region9: #{_dense_to_affine_impl.1} parent=0 // pred_fallthru
    _
  %v20 = vld [vmem:[%s0] sm:$0xff]
  %v21 = vld [vmem:[%s0 + $0x8] sm:$0xff]
  %v22 = vld [vmem:[%s0 + $0x10] sm:$0xff]
  %v23 = vld [vmem:[%s0 + $0x18] sm:$0xff]
  %v24 = vld [vmem:[%s0 + $0x20] sm:$0xff]
  %v25 = vld [vmem:[%s0 + $0x28] sm:$0xff]
  %v26 = vld [vmem:[%s0 + $0x30] sm:$0xff]
  %v27 = vld [vmem:[%s0 + $0x38] sm:$0xff]
  %v28 = vld [vmem:[%s0 + $0x40] sm:$0xff]
  %v29 = vld [vmem:[%s0 + $0x48] sm:$0xff]
  %v30 = vld [vmem:[%s0 + $0x50] sm:$0xff]
  %v31 = vld [vmem:[%s0 + $0x58] sm:$0xff]
  %v32 = vld [vmem:[%s0 + $0x60] sm:$0xff]
  %v33 = vld [vmem:[%s0 + $0x68] sm:$0xff]
  %v34 = vld [vmem:[%s0 + $0x70] sm:$0xff]
  %v35 = vld [vmem:[%s0 + $0x78] sm:$0xff]
  %v36 = vld [vmem:[%s0 + $0x80] sm:$0xff]
  %v37 = vld [vmem:[%s0 + $0x88] sm:$0xff]
  %s38 = smul.u32 0, 8
  %v39 = vlaneseq
  %v40 = vshrl.u32 %v39, 7
  %v41 = vstv %s38
  %v42 = vadd.s32 %v41, %v40
  %v43 = vld [vmem:[%s1] sm:$0x77]
  %v44 = vld [vmem:[%s1 + $0x8] sm:$0x77]
  %v45 = vld [vmem:[%s1 + $0x10] sm:$0x77]
  %v46 = vrot.slane %v20, 4
  %v47 = vadd.f32 %v20, %v46
  %v48 = vrot.slane %v47, 2
  %v49 = vadd.f32 %v47, %v48
  %v50 = vrot.slane %v49, 1
  %v51 = vadd.f32 %v49, %v50
  %v52 = vrot.slane %v21, 4
  %v53 = vadd.f32 %v21, %v52
  %v54 = vrot.slane %v53, 2
  %v55 = vadd.f32 %v53, %v54
  %v56 = vrot.slane %v55, 1
  %v57 = vadd.f32 %v55, %v56
  %v58 = vrot.slane %v22, 4
  %v59 = vadd.f32 %v22, %v58
  %v60 = vrot.slane %v59, 2
  %v61 = vadd.f32 %v59, %v60
  %v62 = vrot.slane %v61, 1
  %v63 = vadd.f32 %v61, %v62
  %v64 = vrot.slane %v23, 4
  %v65 = vadd.f32 %v23, %v64
  %v66 = vrot.slane %v65, 2
  %v67 = vadd.f32 %v65, %v66
  %v68 = vrot.slane %v67, 1
  %v69 = vadd.f32 %v67, %v68
  %v70 = vrot.slane %v24, 4
  %v71 = vadd.f32 %v24, %v70
  %v72 = vrot.slane %v71, 2
  %v73 = vadd.f32 %v71, %v72
  %v74 = vrot.slane %v73, 1
  %v75 = vadd.f32 %v73, %v74
  %v76 = vrot.slane %v25, 4
  %v77 = vadd.f32 %v25, %v76
  %v78 = vrot.slane %v77, 2
  %v79 = vadd.f32 %v77, %v78
  %v80 = vrot.slane %v79, 1
  %v81 = vadd.f32 %v79, %v80
  %v82 = vrot.slane %v26, 4
  %v83 = vadd.f32 %v26, %v82
  %v84 = vrot.slane %v83, 2
  %v85 = vadd.f32 %v83, %v84
  %v86 = vrot.slane %v85, 1
  %v87 = vadd.f32 %v85, %v86
  %v88 = vrot.slane %v27, 4
  %v89 = vadd.f32 %v27, %v88
  %v90 = vrot.slane %v89, 2
  %v91 = vadd.f32 %v89, %v90
  %v92 = vrot.slane %v91, 1
  %v93 = vadd.f32 %v91, %v92
  %v94 = vrot.slane %v28, 4
  %v95 = vadd.f32 %v28, %v94
  %v96 = vrot.slane %v95, 2
  %v97 = vadd.f32 %v95, %v96
  %v98 = vrot.slane %v97, 1
  %v99 = vadd.f32 %v97, %v98
  %v100 = vrot.slane %v29, 4
  %v101 = vadd.f32 %v29, %v100
  %v102 = vrot.slane %v101, 2
  %v103 = vadd.f32 %v101, %v102
  %v104 = vrot.slane %v103, 1
  %v105 = vadd.f32 %v103, %v104
  %v106 = vrot.slane %v30, 4
  %v107 = vadd.f32 %v30, %v106
  %v108 = vrot.slane %v107, 2
  %v109 = vadd.f32 %v107, %v108
  %v110 = vrot.slane %v109, 1
  %v111 = vadd.f32 %v109, %v110
  %v112 = vrot.slane %v31, 4
  %v113 = vadd.f32 %v31, %v112
  %v114 = vrot.slane %v113, 2
  %v115 = vadd.f32 %v113, %v114
  %v116 = vrot.slane %v115, 1
  %v117 = vadd.f32 %v115, %v116
  %v118 = vrot.slane %v32, 4
  %v119 = vadd.f32 %v32, %v118
  %v120 = vrot.slane %v119, 2
  %v121 = vadd.f32 %v119, %v120
  %v122 = vrot.slane %v121, 1
  %v123 = vadd.f32 %v121, %v122
  %v124 = vrot.slane %v33, 4
  %v125 = vadd.f32 %v33, %v124
  %v126 = vrot.slane %v125, 2
  %v127 = vadd.f32 %v125, %v126
  %v128 = vrot.slane %v127, 1
  %v129 = vadd.f32 %v127, %v128
  %v130 = vrot.slane %v34, 4
  %v131 = vadd.f32 %v34, %v130
  %v132 = vrot.slane %v131, 2
  %v133 = vadd.f32 %v131, %v132
  %v134 = vrot.slane %v133, 1
  %v135 = vadd.f32 %v133, %v134
  %v136 = vrot.slane %v35, 4
  %v137 = vadd.f32 %v35, %v136
  %v138 = vrot.slane %v137, 2
  %v139 = vadd.f32 %v137, %v138
  %v140 = vrot.slane %v139, 1
  %v141 = vadd.f32 %v139, %v140
  %v142 = vrot.slane %v36, 4
  %v143 = vadd.f32 %v36, %v142
  %v144 = vrot.slane %v143, 2
  %v145 = vadd.f32 %v143, %v144
  %v146 = vrot.slane %v145, 1
  %v147 = vadd.f32 %v145, %v146
  %v148 = vrot.slane %v37, 4
  %v149 = vadd.f32 %v37, %v148
  %v150 = vrot.slane %v149, 2
  %v151 = vadd.f32 %v149, %v150
  %v152 = vrot.slane %v151, 1
  %v153 = vadd.f32 %v151, %v152
  %v172 = vcombine.low %v51, %v57
  %v173 = vcombine.low %v63, %v69
  %v174 = vcombine.low %v75, %v81
  %v175 = vcombine.low %v87, %v93
  %v176 = vcombine.low %v99, %v105
  %v177 = vcombine.low %v111, %v117
  %v178 = vcombine.low %v123, %v129
  %v179 = vcombine.low %v135, %v141
  %v180 = vcombine.low %v147, %v153
  %v181 = vrot.slane %v175, 7
  %vm182 = vcmask 1041409
  %v183 = vsel %vm182, %v181, %v172
  %vm184 = vcmask 1045509
  %v185 = vsel %vm184, %v181, %v183
  %v186 = vrot.slane %v178, 6
  %vm187 = vcmask 1042434
  %v188 = vsel %vm187, %v186, %v185
  %vm189 = vcmask 1046534
  %v190 = vsel %vm189, %v186, %v188
  %v191 = vrot.slane %v176, 7
  %v192 = vsel %vm182, %v191, %v173
  %v193 = vsel %vm184, %v191, %v192
  %v194 = vrot.slane %v179, 6
  %v195 = vsel %vm187, %v194, %v193
  %v196 = vsel %vm189, %v194, %v195
  %v197 = vrot.slane %v177, 7
  %v198 = vsel %vm182, %v197, %v174
  %v199 = vsel %vm184, %v197, %v198
  %v200 = vrot.slane %v180, 6
  %v201 = vsel %vm187, %v200, %v199
  %v202 = vsel %vm189, %v200, %v201
  %v206 = vadd.f32 %v43, %v190
  %v207 = vadd.f32 %v44, %v196
  %v208 = vadd.f32 %v45, %v202
  %209 = vst [vmem:[%s1] sm:$0x77] %v206
  %210 = vst [vmem:[%s1 + $0x8] sm:$0x77] %v207
  %211 = vst [vmem:[%s1 + $0x10] sm:$0x77] %v208
  %v212 = vld [vmem:[%s2] sm:$0x77]
  %v213 = vld [vmem:[%s2 + $0x8] sm:$0x77]
  %v214 = vld [vmem:[%s2 + $0x10] sm:$0x77]
  %v215 = vcvt.s32.f32 %v42
  %v216 = vmul.f32 %v20, %v215
  %v217 = vmul.f32 %v21, %v215
  %v218 = vmul.f32 %v22, %v215
  %v219 = vmul.f32 %v23, %v215
  %v220 = vmul.f32 %v24, %v215
  %v221 = vmul.f32 %v25, %v215
  %v222 = vmul.f32 %v26, %v215
  %v223 = vmul.f32 %v27, %v215
  %v224 = vmul.f32 %v28, %v215
  %v225 = vmul.f32 %v29, %v215
  %v226 = vmul.f32 %v30, %v215
  %v227 = vmul.f32 %v31, %v215
  %v228 = vmul.f32 %v32, %v215
  %v229 = vmul.f32 %v33, %v215
  %v230 = vmul.f32 %v34, %v215
  %v231 = vmul.f32 %v35, %v215
  %v232 = vmul.f32 %v36, %v215
  %v233 = vmul.f32 %v37, %v215
  %v234 = vrot.slane %v216, 4
  %v235 = vadd.f32 %v216, %v234
  %v236 = vrot.slane %v235, 2
  %v237 = vadd.f32 %v235, %v236
  %v238 = vrot.slane %v237, 1
  %v239 = vadd.f32 %v237, %v238
  %v240 = vrot.slane %v217, 4
  %v241 = vadd.f32 %v217, %v240
  %v242 = vrot.slane %v241, 2
  %v243 = vadd.f32 %v241, %v242
  %v244 = vrot.slane %v243, 1
  %v245 = vadd.f32 %v243, %v244
  %v246 = vrot.slane %v218, 4
  %v247 = vadd.f32 %v218, %v246
  %v248 = vrot.slane %v247, 2
  %v249 = vadd.f32 %v247, %v248
  %v250 = vrot.slane %v249, 1
  %v251 = vadd.f32 %v249, %v250
  %v252 = vrot.slane %v219, 4
  %v253 = vadd.f32 %v219, %v252
  %v254 = vrot.slane %v253, 2
  %v255 = vadd.f32 %v253, %v254
  %v256 = vrot.slane %v255, 1
  %v257 = vadd.f32 %v255, %v256
  %v258 = vrot.slane %v220, 4
  %v259 = vadd.f32 %v220, %v258
  %v260 = vrot.slane %v259, 2
  %v261 = vadd.f32 %v259, %v260
  %v262 = vrot.slane %v261, 1
  %v263 = vadd.f32 %v261, %v262
  %v264 = vrot.slane %v221, 4
  %v265 = vadd.f32 %v221, %v264
  %v266 = vrot.slane %v265, 2
  %v267 = vadd.f32 %v265, %v266
  %v268 = vrot.slane %v267, 1
  %v269 = vadd.f32 %v267, %v268
  %v270 = vrot.slane %v222, 4
  %v271 = vadd.f32 %v222, %v270
  %v272 = vrot.slane %v271, 2
  %v273 = vadd.f32 %v271, %v272
  %v274 = vrot.slane %v273, 1
  %v275 = vadd.f32 %v273, %v274
  %v276 = vrot.slane %v223, 4
  %v277 = vadd.f32 %v223, %v276
  %v278 = vrot.slane %v277, 2
  %v279 = vadd.f32 %v277, %v278
  %v280 = vrot.slane %v279, 1
  %v281 = vadd.f32 %v279, %v280
  %v282 = vrot.slane %v224, 4
  %v283 = vadd.f32 %v224, %v282
  %v284 = vrot.slane %v283, 2
  %v285 = vadd.f32 %v283, %v284
  %v286 = vrot.slane %v285, 1
  %v287 = vadd.f32 %v285, %v286
  %v288 = vrot.slane %v225, 4
  %v289 = vadd.f32 %v225, %v288
  %v290 = vrot.slane %v289, 2
  %v291 = vadd.f32 %v289, %v290
  %v292 = vrot.slane %v291, 1
  %v293 = vadd.f32 %v291, %v292
  %v294 = vrot.slane %v226, 4
  %v295 = vadd.f32 %v226, %v294
  %v296 = vrot.slane %v295, 2
  %v297 = vadd.f32 %v295, %v296
  %v298 = vrot.slane %v297, 1
  %v299 = vadd.f32 %v297, %v298
  %v300 = vrot.slane %v227, 4
  %v301 = vadd.f32 %v227, %v300
  %v302 = vrot.slane %v301, 2
  %v303 = vadd.f32 %v301, %v302
  %v304 = vrot.slane %v303, 1
  %v305 = vadd.f32 %v303, %v304
  %v306 = vrot.slane %v228, 4
  %v307 = vadd.f32 %v228, %v306
  %v308 = vrot.slane %v307, 2
  %v309 = vadd.f32 %v307, %v308
  %v310 = vrot.slane %v309, 1
  %v311 = vadd.f32 %v309, %v310
  %v312 = vrot.slane %v229, 4
  %v313 = vadd.f32 %v229, %v312
  %v314 = vrot.slane %v313, 2
  %v315 = vadd.f32 %v313, %v314
  %v316 = vrot.slane %v315, 1
  %v317 = vadd.f32 %v315, %v316
  %v318 = vrot.slane %v230, 4
  %v319 = vadd.f32 %v230, %v318
  %v320 = vrot.slane %v319, 2
  %v321 = vadd.f32 %v319, %v320
  %v322 = vrot.slane %v321, 1
  %v323 = vadd.f32 %v321, %v322
  %v324 = vrot.slane %v231, 4
  %v325 = vadd.f32 %v231, %v324
  %v326 = vrot.slane %v325, 2
  %v327 = vadd.f32 %v325, %v326
  %v328 = vrot.slane %v327, 1
  %v329 = vadd.f32 %v327, %v328
  %v330 = vrot.slane %v232, 4
  %v331 = vadd.f32 %v232, %v330
  %v332 = vrot.slane %v331, 2
  %v333 = vadd.f32 %v331, %v332
  %v334 = vrot.slane %v333, 1
  %v335 = vadd.f32 %v333, %v334
  %v336 = vrot.slane %v233, 4
  %v337 = vadd.f32 %v233, %v336
  %v338 = vrot.slane %v337, 2
  %v339 = vadd.f32 %v337, %v338
  %v340 = vrot.slane %v339, 1
  %v341 = vadd.f32 %v339, %v340
  %v360 = vcombine.low %v239, %v245
  %v361 = vcombine.low %v251, %v257
  %v362 = vcombine.low %v263, %v269
  %v363 = vcombine.low %v275, %v281
  %v364 = vcombine.low %v287, %v293
  %v365 = vcombine.low %v299, %v305
  %v366 = vcombine.low %v311, %v317
  %v367 = vcombine.low %v323, %v329
  %v368 = vcombine.low %v335, %v341
  %v369 = vrot.slane %v363, 7
  %v370 = vsel %vm182, %v369, %v360
  %v371 = vsel %vm184, %v369, %v370
  %v372 = vrot.slane %v366, 6
  %v373 = vsel %vm187, %v372, %v371
  %v374 = vsel %vm189, %v372, %v373
  %v375 = vrot.slane %v364, 7
  %v376 = vsel %vm182, %v375, %v361
  %v377 = vsel %vm184, %v375, %v376
  %v378 = vrot.slane %v367, 6
  %v379 = vsel %vm187, %v378, %v377
  %v380 = vsel %vm189, %v378, %v379
  %v381 = vrot.slane %v365, 7
  %v382 = vsel %vm182, %v381, %v362
  %v383 = vsel %vm184, %v381, %v382
  %v384 = vrot.slane %v368, 6
  %v385 = vsel %vm187, %v384, %v383
  %v386 = vsel %vm189, %v384, %v385
  %v390 = vadd.f32 %v212, %v374
  %v391 = vadd.f32 %v213, %v380
  %v392 = vadd.f32 %v214, %v386
  %393 = vst [vmem:[%s2] sm:$0x77] %v390
  %394 = vst [vmem:[%s2 + $0x8] sm:$0x77] %v391
  %395 = vst [vmem:[%s2 + $0x10] sm:$0x77] %v392
  // Predicated region
  $region10: #{_dense_to_affine_impl.1} parent=0 // pred_check
    _
  $region11: #{_dense_to_affine_impl.1} parent=0 // pred_check_branch
    %397 = sbr.rel (0) target = $region13
  $region12: #{_dense_to_affine_impl.1} parent=0 // pred_region
    _
  $region13: #{_dense_to_affine_impl.1} parent=0 // pred_fallthru
    _
  // Predicated region
  $region14: #{_dense_to_affine_impl.1} parent=0 // pred_check
    _
  $region15: #{_dense_to_affine_impl.1} parent=0 // pred_check_branch
    %399 = sbr.rel (0) target = $region17
  $region16: #{_dense_to_affine_impl.1} parent=0 // pred_region
    _
  $region17: #{_dense_to_affine_impl.1} parent=0 // pred_fallthru
    _
  // Predicated region
  $region18: #{_dense_to_affine_impl.1} parent=0 // pred_check
    _
  $region19: #{_dense_to_affine_impl.1} parent=0 // pred_check_branch
    %401 = sbr.rel (0) target = $region21
  $region20: #{_dense_to_affine_impl.1} parent=0 // pred_region
    _
  $region21: #{_dense_to_affine_impl.1} parent=0 // pred_fallthru
    _
  // Predicated region
  $region22: #{_dense_to_affine_impl.1} parent=0 // pred_check
    _
  $region23: #{_dense_to_affine_impl.1} parent=0 // pred_check_branch
    %403 = sbr.rel (0) target = $region25
  $region24: #{_dense_to_affine_impl.1} parent=0 // pred_region
    _
  $region25: #{_dense_to_affine_impl.1} parent=0 // pred_fallthru
    _

// kernel: neg.4
$region0: #{neg.4}
  #allocation0 [shape = 's32[1]{0}', space=sflag, size = 0x4, scoped, tag = 'scoped memory for neg.4']
  %s0 = inlined_call_operand.vmem [shape: f32[3], index: 0, kind: input, shape index: {}]
  %s1 = inlined_call_operand.vmem [shape: f32[3], index: 1, kind: output, shape index: {}]
  %v2 = vld [vmem:[%s0] sm:$0x1]
  %3 = xla_tuple %v2
  %4 = xla_tuple %3
  %v5 = vxor.u32 %v2, 2147483648
  %6 = xla_tuple %v5
  %7 = vst [vmem:[%s1] sm:$0x1] %v5

</llo_original>
